<compile_context>
chip_gen: v7x
topology: tpu7x:2x2x1
jax: 0.10.0
libtpu: 0.0.40
codegen_flags: <defaults>
</compile_context>

<pallas_src>
import numpy as np
import jax
import jax.numpy as jnp
from jax.experimental import pallas as pl
from jax.experimental.pallas import tpu as pltpu


def _node_transform_kernel(item_id_ref,    # SMEM scalar prefetch: [1] int32
                           node_type_ref,  # [TILE_N, 1] int32
                           x_ref,          # [TILE_N, C] float32
                           wT_ref,         # [C, H]      float32  (Linear weight, transposed)
                           eb_ref,         # [T+1, H]    float32  (embedding table, bias appended)
                           out_ref):       # [TILE_N, H] out_dtype
    item_id = item_id_ref[0]
    nt = node_type_ref[...]                       # [tn, 1] int32
    mask = nt == item_id                          # [tn, 1] bool: "item" rows -> Linear path
    mask_f = mask.astype(jnp.float32)

    tn = x_ref.shape[0]
    n_sel = eb_ref.shape[0]                       # T + 1 (last row of eb is the bias)

    # Selector for the fused gather matmul:
    #   column t < T : 1.0 where node_type == t and the row is NOT an item row
    #   column T     : 1.0 where the row IS an item row (adds the Linear bias)
    col = jax.lax.broadcasted_iota(jnp.int32, (tn, n_sel), 1)
    emb_sel = ((nt == col) & jnp.logical_not(mask)).astype(jnp.float32)
    sel = jnp.where(col < n_sel - 1, emb_sel, mask_f)          # [tn, T+1] f32

    # Item rows: x @ W.T   (non-item rows contribute exact zeros via the mask).
    lin = jnp.dot(mask_f * x_ref[...], wT_ref[...],
                  preferred_element_type=jnp.float32)
    # Embedding copy for non-item rows + bias for item rows, as one matmul.
    gathered = jnp.dot(sel, eb_ref[...], preferred_element_type=jnp.float32)

    out_ref[...] = (lin + gathered).astype(out_ref.dtype)


def node_transformation(x, node_type, item_id, emb_weight, lin_weight, lin_bias,
                        *, tile_n=1024, out_dtype=jnp.float32):
    """Forward pass of Node_Transformation.

    x:          [N, C]  float
    node_type:  [N]     int
    item_id:    scalar  int
    emb_weight: [T, H]  float  (nn.Embedding(T, H).weight)
    lin_weight: [H, C]  float  (nn.Linear(C, H).weight, PyTorch [out, in] layout)
    lin_bias:   [H]     float
    Returns [N, H] in out_dtype (float32 = exact module parity; bfloat16 halves
    the dominant HBM write stream if downstream tolerates it).
    """
    N, C = x.shape
    T, H = emb_weight.shape
    f32 = jnp.float32
    out_itemsize = np.dtype(out_dtype).itemsize

    # ---- Row tiling --------------------------------------------------------
    # Big default tile (amortizes ~0.35us/step overhead), aligned to the
    # sublane/packing granularity, capped so there are always >= 2 grid steps
    # (the "parallel" axis then feeds both v7x TensorCores).
    row_align = 8 if out_itemsize >= 4 else 16
    n_al = ((N + row_align - 1) // row_align) * row_align
    tn = min(int(tile_n), n_al)
    if n_al > row_align and tn >= n_al:
        tn = ((n_al // 2 + row_align - 1) // row_align) * row_align
    tn = max(tn, row_align)
    N_pad = ((N + tn - 1) // tn) * tn
    num_tiles = N_pad // tn

    # ---- Operand prep (avoid full-array wrapper passes) --------------------
    x_in = x if x.dtype == f32 else x.astype(f32)        # read f32 directly in-kernel
    nt_in = node_type.astype(jnp.int32).reshape(N, 1)
    if N_pad != N:                                        # pad rows only when needed
        x_in = jnp.pad(x_in, ((0, N_pad - N), (0, 0)))
        nt_in = jnp.pad(nt_in, ((0, N_pad - N), (0, 0)), constant_values=-1)

    # Tiny one-time resident tables (kept f32: the embedding branch is a copy).
    wT = lin_weight.astype(f32).T                                          # [C, H]
    eb = jnp.concatenate([emb_weight.astype(f32),
                          lin_bias.astype(f32).reshape(1, H)], axis=0)     # [T+1, H]
    item_id_arr = jnp.asarray([item_id], dtype=jnp.int32)

    # ---- VMEM accounting ----------------------------------------------------
    resident_bytes = (C * H + (T + 1) * H) * 4
    # Very large resident weights (big C*H): single-buffer them so v7x's 64 MiB
    # VMEM is not consumed twice.  Tiny tables (like this demo) stay default.
    single_buf_resident = resident_bytes > (4 << 20)
    resident_kwargs = {"pipeline_mode": pl.Buffered(1)} if single_buf_resident else {}
    res_bufs = 1 if single_buf_resident else 2
    # x tile + node_type tile (lane-padded int32) + output tile, double-buffered.
    tile_bytes = tn * (C * 4 + 128 * 4 + H * out_itemsize)
    vmem_limit = int(2 * tile_bytes * 1.5) + res_bufs * resident_bytes + (4 << 20)
    vmem_limit = max(32 << 20, min(vmem_limit, 96 << 20))

    grid_spec = pltpu.PrefetchScalarGridSpec(
        num_scalar_prefetch=1,
        grid=(num_tiles,),
        in_specs=[
            pl.BlockSpec((tn, 1), lambda i, item: (i, 0)),                       # node_type tile
            pl.BlockSpec((tn, C), lambda i, item: (i, 0)),                       # x tile (f32)
            pl.BlockSpec((C, H), lambda i, item: (0, 0), **resident_kwargs),     # W.T  (resident)
            pl.BlockSpec((T + 1, H), lambda i, item: (0, 0), **resident_kwargs),  # [E;b] (resident)
        ],
        # Unpadded hidden dim: full-H last block dim => no write amplification
        # and no output column slice.
        out_specs=pl.BlockSpec((tn, H), lambda i, item: (i, 0)),
    )

    out = pl.pallas_call(
        _node_transform_kernel,
        out_shape=jax.ShapeDtypeStruct((N_pad, H), out_dtype),
        grid_spec=grid_spec,
        compiler_params=pltpu.CompilerParams(
            dimension_semantics=("parallel",),
            vmem_limit_bytes=vmem_limit),
    )(item_id_arr, nt_in, x_in, wT, eb)

    return out if N_pad == N else out[:N]


def _xavier_normal(key, shape):
    fan_out, fan_in = shape
    std = (2.0 / (fan_in + fan_out)) ** 0.5
    return std * jax.random.normal(key, shape, dtype=jnp.float32)


if __name__ == "__main__":
    # Small deterministic problem: N=64 nodes, in_channels=4, hidden=32, 4 node
    # types.  The default tile (1024) is capped to 32 rows here -> 2 grid steps,
    # exercising the pipelined / megacore-friendly path.
    N, C, H, T = 64, 4, 32, 4
    item_id = 2

    key = jax.random.PRNGKey(0)
    k_x, k_nt, k_emb, k_w, k_b = jax.random.split(key, 5)

    x = jax.random.normal(k_x, (N, C), dtype=jnp.float32)
    node_type = jax.random.randint(k_nt, (N,), 0, T, dtype=jnp.int32)

    emb_weight = _xavier_normal(k_emb, (T, H))       # nn.Embedding(T, H).weight
    lin_weight = _xavier_normal(k_w, (H, C))         # nn.Linear(C, H).weight ([out, in])
    lin_bias = 0.01 * jax.random.normal(k_b, (H,), dtype=jnp.float32)

    out = node_transformation(x, node_type, item_id, emb_weight, lin_weight, lin_bias)
    out = jax.block_until_ready(out)
    assert out.shape == (N, H)
    assert out.dtype == jnp.float32

    # f32 reference matching the module semantics.
    lin_f32 = jnp.dot(x, lin_weight.T, precision=jax.lax.Precision.HIGHEST) + lin_bias
    ref = jnp.where((node_type == item_id)[:, None], lin_f32, emb_weight[node_type])
    assert jnp.allclose(out, ref, atol=1e-4, rtol=1e-4), "mismatch vs f32 reference"

    # Embedding branch should be a (near-)exact copy of the f32 embedding rows.
    emb_lookup = emb_weight[node_type]
    emb_mask = (node_type != item_id)[:, None]
    emb_err = jnp.max(jnp.where(emb_mask, jnp.abs(out - emb_lookup), 0.0))
    assert float(emb_err) <= 1e-4, f"embedding copy drift too large: {float(emb_err)}"

    # Optional bf16 output (halves the dominant HBM write stream).
    out_bf16 = node_transformation(x, node_type, item_id, emb_weight, lin_weight,
                                   lin_bias, out_dtype=jnp.bfloat16)
    out_bf16 = jax.block_until_ready(out_bf16)
    assert out_bf16.dtype == jnp.bfloat16
    assert jnp.allclose(out_bf16.astype(jnp.float32), ref, atol=1e-2, rtol=2e-2)

    print("KERNEL_OK")
</pallas_src>

<mosaic_0001>
module attributes {stable_mosaic.version = 11 : i64} {
  func.func @_node_transform_kernel(%arg0: i32, %arg1: memref<1xi32, #tpu.memory_space<smem>>, %arg2: memref<32x1xi32, #tpu.memory_space<vmem>>, %arg3: memref<32x4xf32, #tpu.memory_space<vmem>>, %arg4: memref<4x32xf32, #tpu.memory_space<vmem>>, %arg5: memref<5x32xf32, #tpu.memory_space<vmem>>, %arg6: memref<32x32xf32, #tpu.memory_space<vmem>>) attributes {dimension_semantics = [#tpu.dimension_semantics<parallel>], iteration_bounds = array<i64: 2>, scalar_prefetch = 1 : i64, scratch_operands = 0 : i64, tpu.core_type = #tpu.core_type<tc>, window_params = [{transform_indices = @transform_0, window_bounds = array<i64: 32, 1>}, {transform_indices = @transform_1, window_bounds = array<i64: 32, 4>}, {pipeline_mode = #tpu.pipeline_mode<synchronous>, transform_indices = @transform_2, window_bounds = array<i64: 4, 32>}, {pipeline_mode = #tpu.pipeline_mode<synchronous>, transform_indices = @transform_3, window_bounds = array<i64: 5, 32>}, {transform_indices = @transform_4, window_bounds = array<i64: 32, 32>}]} {
    %c0 = arith.constant 0 : index
    %0 = memref.load %arg1[%c0] : memref<1xi32, #tpu.memory_space<smem>>
    %c0_0 = arith.constant 0 : index
    %c0_1 = arith.constant 0 : index
    %1 = vector.load %arg2[%c0_0, %c0_1] : memref<32x1xi32, #tpu.memory_space<vmem>>, vector<32x1xi32>
    %2 = vector.broadcast %0 : i32 to vector<32x1xi32>
    %3 = arith.cmpi eq, %1, %2 : vector<32x1xi32>
    %4 = arith.extui %3 : vector<32x1xi1> to vector<32x1xi32>
    %5 = arith.sitofp %4 : vector<32x1xi32> to vector<32x1xf32>
    %6 = tpu.iota {dimensions = array<i32: 1>} : vector<32x5xi32>
    %7 = vector.broadcast %1 : vector<32x1xi32> to vector<32x5xi32>
    %8 = arith.cmpi eq, %7, %6 : vector<32x5xi32>
    %cst = arith.constant dense<true> : vector<32x1xi1>
    %9 = arith.xori %3, %cst : vector<32x1xi1>
    %10 = vector.broadcast %9 : vector<32x1xi1> to vector<32x5xi1>
    %11 = arith.andi %8, %10 : vector<32x5xi1>
    %12 = arith.extui %11 : vector<32x5xi1> to vector<32x5xi32>
    %13 = arith.sitofp %12 : vector<32x5xi32> to vector<32x5xf32>
    %c4_i32 = arith.constant 4 : i32
    %14 = vector.broadcast %c4_i32 : i32 to vector<32x5xi32>
    %15 = arith.cmpi slt, %6, %14 : vector<32x5xi32>
    %16 = vector.shape_cast %5 : vector<32x1xf32> to vector<32x1xf32>
    %17 = vector.broadcast %16 : vector<32x1xf32> to vector<32x5xf32>
    %18 = arith.select %15, %13, %17 : vector<32x5xi1>, vector<32x5xf32>
    %c0_2 = arith.constant 0 : index
    %c0_3 = arith.constant 0 : index
    %19 = vector.load %arg3[%c0_2, %c0_3] : memref<32x4xf32, #tpu.memory_space<vmem>>, vector<32x4xf32>
    %20 = vector.broadcast %5 : vector<32x1xf32> to vector<32x4xf32>
    %21 = arith.mulf %20, %19 : vector<32x4xf32>
    %c0_4 = arith.constant 0 : index
    %c0_5 = arith.constant 0 : index
    %22 = vector.load %arg4[%c0_4, %c0_5] : memref<4x32xf32, #tpu.memory_space<vmem>>, vector<4x32xf32>
    %cst_6 = arith.constant dense<0.000000e+00> : vector<32x32xf32>
    %23 = tpu.matmul %21, %22, %cst_6 {dimension_numbers = #tpu.dot_dimension_numbers<[1], [0], [0], [1], [0, 0, 1, 1], [], []>} : vector<32x4xf32>, vector<4x32xf32>, vector<32x32xf32> -> vector<32x32xf32>
    %c0_7 = arith.constant 0 : index
    %c0_8 = arith.constant 0 : index
    %24 = vector.load %arg5[%c0_7, %c0_8] : memref<5x32xf32, #tpu.memory_space<vmem>>, vector<5x32xf32>
    %cst_9 = arith.constant dense<0.000000e+00> : vector<32x32xf32>
    %25 = tpu.matmul %18, %24, %cst_9 {dimension_numbers = #tpu.dot_dimension_numbers<[1], [0], [0], [1], [0, 0, 1, 1], [], []>} : vector<32x5xf32>, vector<5x32xf32>, vector<32x32xf32> -> vector<32x32xf32>
    %26 = arith.addf %23, %25 : vector<32x32xf32>
    %c0_10 = arith.constant 0 : index
    %c0_11 = arith.constant 0 : index
    %27 = vector.load %arg6[%c0_10, %c0_11] : memref<32x32xf32, #tpu.memory_space<vmem>>, vector<32x32xf32>
    tpu.vector_store %arg6[%c0_10, %c0_11], %26 {strides = array<i32>} : memref<32x32xf32, #tpu.memory_space<vmem>>, vector<32x32xf32>,
    return
  }
  func.func @transform_0(%arg0: i32, %arg1: memref<1xi32, #tpu.memory_space<smem>>) -> (i32, i32) {
    %c0_i32 = arith.constant 0 : i32
    %c0_i32_0 = arith.constant 0 : i32
    return %arg0, %c0_i32 : i32, i32
  }
  func.func @transform_1(%arg0: i32, %arg1: memref<1xi32, #tpu.memory_space<smem>>) -> (i32, i32) {
    %c0_i32 = arith.constant 0 : i32
    %c0_i32_0 = arith.constant 0 : i32
    return %arg0, %c0_i32 : i32, i32
  }
  func.func @transform_2(%arg0: i32, %arg1: memref<1xi32, #tpu.memory_space<smem>>) -> (i32, i32) {
    %c0_i32 = arith.constant 0 : i32
    %c0_i32_0 = arith.constant 0 : i32
    %c0_i32_1 = arith.constant 0 : i32
    return %c0_i32, %c0_i32_0 : i32, i32
  }
  func.func @transform_3(%arg0: i32, %arg1: memref<1xi32, #tpu.memory_space<smem>>) -> (i32, i32) {
    %c0_i32 = arith.constant 0 : i32
    %c0_i32_0 = arith.constant 0 : i32
    %c0_i32_1 = arith.constant 0 : i32
    return %c0_i32, %c0_i32_0 : i32, i32
  }
  func.func @transform_4(%arg0: i32, %arg1: memref<1xi32, #tpu.memory_space<smem>>) -> (i32, i32) {
    %c0_i32 = arith.constant 0 : i32
    %c0_i32_0 = arith.constant 0 : i32
    return %arg0, %c0_i32 : i32, i32
  }
}

</mosaic_0001>

<llo_original>
// kernel: tpu_custom_call.1
$region0: #{tpu_custom_call.1}
  #allocation0 [shape = 'u32[]', space=smem, size = 0x4, offset = 0x4, fixed_abs, tag = 'smem constant byte address 0x4 - core index']
  #allocation1 [shape = 'u32[144,128]{1,0:T(1,128)}', space=vmem, size = 0x12000, scoped, tag = 'internal scratch']
  #allocation2 [shape = 's32[1]{0}', space=sflag, size = 0x4, scoped, tag = 'scoped memory for tpu_custom_call.1']
  #allocation3 [shape = 's32[1]{0:T(128)S(6)}', space=smem, size = 0x200, scoped, tag = 'prefetched SMEM operand 0']
  %s0 = inlined_call_operand.<no memory space> [shape: s32[1], index: 0, kind: input, shape index: {}]
  %s1 = inlined_call_operand.vmem [shape: s32[64,1], index: 1, kind: input, shape index: {}]
  %s2 = inlined_call_operand.vmem [shape: f32[64,4], index: 2, kind: input, shape index: {}]
  %s3 = inlined_call_operand.vmem [shape: f32[4,32], index: 3, kind: input, shape index: {}]
  %s4 = inlined_call_operand.vmem [shape: f32[5,32], index: 4, kind: input, shape index: {}]
  %s5 = inlined_call_operand.vmem [shape: f32[64,32], index: 5, kind: output, shape index: {}]
  %s6 = sld [smem:[#allocation0]]
  $region49: #{tpu_custom_call.1} parent=0
    _
  %s8 = ssub.s32 1, %s6
  %s9 = scalar_select 0, %s8, %s6
  %10 = sst [smem:[#allocation3]] %s0
  loop: start=0, step=1, limit=4
  $region2: #{tpu_custom_call.1} parent=0 // loop_pre_header
    _
  $region3: #{tpu_custom_call.1} parent=0 // loop_header
    %s12 = sphi 0, %s16
    %p13 = scmp.ge.s32.totalorder %s12, 4
    %s22 = sphi 0, %s24
    %s25 = sphi 0, %s22
    %s26 = sphi 0, %s25
    %s42 = sphi 0, %s26
    %s48 = sphi 0, %s50
    %s51 = sphi 0, %s48
    %s52 = sphi 0, %s51
    %s68 = sphi 0, %s52
    %s72 = sphi 0, %s72
    %s74 = sphi 0, %s72
    %s75 = sphi 0, %s74
    %s89 = sphi 0, %s75
    %s93 = sphi 0, %s93
    %s95 = sphi 0, %s93
    %s96 = sphi 0, %s95
    %s110 = sphi 0, %s96
    %s116 = sphi 0, %s118
    %s119 = sphi 0, %s116
    %s120 = sphi 0, %s119
    %s136 = sphi 0, %s120
  $region4: #{tpu_custom_call.1} parent=0 // loop_header_branch
    %15 = sbr.rel (%p13) target = $region8
  $region5: #{tpu_custom_call.1} parent=0 // loop_body
    %s17 = ssub.s32 %s12, 1
    %s18 = ssub.s32 %s12, 2
    %s19 = sadd.s32 %s12, 1
    %s20 = ssub.s32 %s12, %s19
    %p21 = scmp.eq.s32.totalorder %s20, 0
    %s23 = sadd.s32 %s22, 1
    %s24 = scalar_select %p21, %s22, %s23
    %p27 = pneg %p21
    %p28 = scmp.eq.s32.totalorder %s12, 1
    %p29 = por %p27, %p28
    %p30 = scmp.ne.s32.totalorder %s22, %s25
    %p31 = scmp.eq.s32.totalorder %s12, 0
    %p32 = por %p30, %p31
    %p33 = scmp.ne.s32.totalorder %s22, %s25
    %p34 = scmp.eq.s32.totalorder %s17, 1
    %p35 = por %p33, %p34
    %p36 = scmp.ne.s32.totalorder %s25, %s26
    %p37 = scmp.eq.s32.totalorder %s17, 0
    %p38 = por %p36, %p37
    %p39 = scmp.ne.s32.totalorder %s25, %s26
    %p40 = scmp.eq.s32.totalorder %s18, 1
    %p41 = por %p39, %p40
    %p43 = scmp.ne.s32.totalorder %s26, %s42
    %p44 = scmp.eq.s32.totalorder %s18, 0
    %p45 = por %p43, %p44
    %s46 = ssub.s32 %s12, %s19
    %p47 = scmp.eq.s32.totalorder %s46, 0
    %s49 = sadd.s32 %s48, 1
    %s50 = scalar_select %p47, %s48, %s49
    %p53 = pneg %p47
    %p54 = scmp.eq.s32.totalorder %s12, 1
    %p55 = por %p53, %p54
    %p56 = scmp.ne.s32.totalorder %s48, %s51
    %p57 = scmp.eq.s32.totalorder %s12, 0
    %p58 = por %p56, %p57
    %p59 = scmp.ne.s32.totalorder %s48, %s51
    %p60 = scmp.eq.s32.totalorder %s17, 1
    %p61 = por %p59, %p60
    %p62 = scmp.ne.s32.totalorder %s51, %s52
    %p63 = scmp.eq.s32.totalorder %s17, 0
    %p64 = por %p62, %p63
    %p65 = scmp.ne.s32.totalorder %s51, %s52
    %p66 = scmp.eq.s32.totalorder %s18, 1
    %p67 = por %p65, %p66
    %p69 = scmp.ne.s32.totalorder %s52, %s68
    %p70 = scmp.eq.s32.totalorder %s18, 0
    %p71 = por %p69, %p70
    %s73 = sadd.s32 %s72, 1
    %p76 = scmp.eq.s32.totalorder %s12, 1
    %p77 = scmp.ne.s32.totalorder %s72, %s74
    %p78 = scmp.eq.s32.totalorder %s12, 0
    %p79 = por %p77, %p78
    %p80 = scmp.ne.s32.totalorder %s72, %s74
    %p81 = scmp.eq.s32.totalorder %s17, 1
    %p82 = por %p80, %p81
    %p83 = scmp.ne.s32.totalorder %s74, %s75
    %p84 = scmp.eq.s32.totalorder %s17, 0
    %p85 = por %p83, %p84
    %p86 = scmp.ne.s32.totalorder %s74, %s75
    %p87 = scmp.eq.s32.totalorder %s18, 1
    %p88 = por %p86, %p87
    %p90 = scmp.ne.s32.totalorder %s75, %s89
    %p91 = scmp.eq.s32.totalorder %s18, 0
    %p92 = por %p90, %p91
    %s94 = sadd.s32 %s93, 1
    %p97 = scmp.eq.s32.totalorder %s12, 1
    %p98 = scmp.ne.s32.totalorder %s93, %s95
    %p99 = scmp.eq.s32.totalorder %s12, 0
    %p100 = por %p98, %p99
    %p101 = scmp.ne.s32.totalorder %s93, %s95
    %p102 = scmp.eq.s32.totalorder %s17, 1
    %p103 = por %p101, %p102
    %p104 = scmp.ne.s32.totalorder %s95, %s96
    %p105 = scmp.eq.s32.totalorder %s17, 0
    %p106 = por %p104, %p105
    %p107 = scmp.ne.s32.totalorder %s95, %s96
    %p108 = scmp.eq.s32.totalorder %s18, 1
    %p109 = por %p107, %p108
    %p111 = scmp.ne.s32.totalorder %s96, %s110
    %p112 = scmp.eq.s32.totalorder %s18, 0
    %p113 = por %p111, %p112
    %s114 = ssub.s32 %s12, %s19
    %p115 = scmp.eq.s32.totalorder %s114, 0
    %s117 = sadd.s32 %s116, 1
    %s118 = scalar_select %p115, %s116, %s117
    %p121 = pneg %p115
    %p122 = scmp.eq.s32.totalorder %s12, 1
    %p123 = por %p121, %p122
    %p124 = scmp.ne.s32.totalorder %s116, %s119
    %p125 = scmp.eq.s32.totalorder %s12, 0
    %p126 = por %p124, %p125
    %p127 = scmp.ne.s32.totalorder %s116, %s119
    %p128 = scmp.eq.s32.totalorder %s17, 1
    %p129 = por %p127, %p128
    %p130 = scmp.ne.s32.totalorder %s119, %s120
    %p131 = scmp.eq.s32.totalorder %s17, 0
    %p132 = por %p130, %p131
    %p133 = scmp.ne.s32.totalorder %s119, %s120
    %p134 = scmp.eq.s32.totalorder %s18, 1
    %p135 = por %p133, %p134
    %p137 = scmp.ne.s32.totalorder %s120, %s136
    %p138 = scmp.eq.s32.totalorder %s18, 0
    %p139 = por %p137, %p138
    %p140 = scmp.le.s32.totalorder 1, %s12
    %p141 = scmp.lt.s32.totalorder %s12, 3
    %p142 = pnand %p140, %p141
    %p143 = pneg %p142
    // Predicated region
    $region9: #{tpu_custom_call.1} parent=5 // pred_check
      _
    $region10: #{tpu_custom_call.1} parent=5 // pred_check_branch
      %145 = sbr.rel (%p142) target = $region12
    $region11: #{tpu_custom_call.1} parent=5 // pred_region
      %s146 = ssub.s32 %s12, 1
      // Predicated region
      $region13: #{tpu_custom_call.1} parent=11 // pred_check
        %p147 = pneg %p85
      $region14: #{tpu_custom_call.1} parent=11 // pred_check_branch
        %149 = sbr.rel (%p147) target = $region16
      $region15: #{tpu_custom_call.1} parent=11 // pred_region
        _
      $region16: #{tpu_custom_call.1} parent=11 // pred_fallthru
        _
      // Predicated region
      $region17: #{tpu_custom_call.1} parent=11 // pred_check
        %p150 = pneg %p106
      $region18: #{tpu_custom_call.1} parent=11 // pred_check_branch
        %152 = sbr.rel (%p150) target = $region20
      $region19: #{tpu_custom_call.1} parent=11 // pred_region
        _
      $region20: #{tpu_custom_call.1} parent=11 // pred_fallthru
        _
    $region12: #{tpu_custom_call.1} parent=5 // pred_fallthru
      _
    %p153 = scmp.lt.s32.totalorder %s12, 2
    // Predicated region
    $region21: #{tpu_custom_call.1} parent=5 // pred_check
      %p154 = pneg %p153
    $region22: #{tpu_custom_call.1} parent=5 // pred_check_branch
      %156 = sbr.rel (%p154) target = $region24
    $region23: #{tpu_custom_call.1} parent=5 // pred_region
      // Predicated region
      $region25: #{tpu_custom_call.1} parent=23 // pred_check
        %p157 = pneg %p32
      $region26: #{tpu_custom_call.1} parent=23 // pred_check_branch
        %159 = sbr.rel (%p157) target = $region28
      $region27: #{tpu_custom_call.1} parent=23 // pred_region
        %s160 = smul.u32 4, %s12
        %p161 = scmp.lt.s32.totalorder %s160, 7
        %s162 = scalar_select %p161, %s160, 7
        %s163 = smul.addr %s162, 8
        %s164 = scalar_lea.vmem %s1, %s163
        %s165 = smul.u32 4, %s12
      $region28: #{tpu_custom_call.1} parent=23 // pred_fallthru
        _
      // Predicated region
      $region29: #{tpu_custom_call.1} parent=23 // pred_check
        %p166 = pneg %p58
      $region30: #{tpu_custom_call.1} parent=23 // pred_check_branch
        %168 = sbr.rel (%p166) target = $region32
      $region31: #{tpu_custom_call.1} parent=23 // pred_region
        %s169 = smul.u32 4, %s12
        %p170 = scmp.lt.s32.totalorder %s169, 7
        %s171 = scalar_select %p170, %s169, 7
        %s172 = smul.addr %s171, 8
        %s173 = scalar_lea.vmem %s2, %s172
        %s174 = smul.u32 4, %s12
      $region32: #{tpu_custom_call.1} parent=23 // pred_fallthru
        _
    $region24: #{tpu_custom_call.1} parent=5 // pred_fallthru
      _
    %p175 = scmp.le.s32.totalorder 1, %s12
    %p176 = scmp.lt.s32.totalorder %s12, 3
    %p177 = pnand %p175, %p176
    %p178 = pneg %p177
    // Predicated region
    $region33: #{tpu_custom_call.1} parent=5 // pred_check
      _
    $region34: #{tpu_custom_call.1} parent=5 // pred_check_branch
      %180 = sbr.rel (%p177) target = $region36
    $region35: #{tpu_custom_call.1} parent=5 // pred_region
      %s181 = ssub.s32 %s12, 1
      %s182 = smul.u32 4, %s17
      %p183 = scmp.lt.s32.totalorder %s182, 7
      %s184 = scalar_select %p183, %s182, 7
      %s185 = smul.addr %s184, 8
      %s186 = scalar_lea.vmem %s1, %s185
      %p187 = pneg %p38
      %p188 = pneg %p35
      %s189 = smul.u32 4, %s17
      %p190 = scmp.lt.s32.totalorder %s189, 7
      %s191 = scalar_select %p190, %s189, 7
      %s192 = smul.addr %s191, 8
      %s193 = scalar_lea.vmem %s2, %s192
      %p194 = pneg %p64
      %p195 = pneg %p61
      %p196 = pneg %p85
      %p197 = pneg %p82
      %p198 = pneg %p106
      %p199 = pneg %p103
      %p200 = pneg %p132
      %p201 = pneg %p129
      %s202 = smul.u32 4, %s17
      %p203 = scmp.lt.s32.totalorder %s202, 7
      %s204 = scalar_select %p203, %s202, 7
      %s205 = smul.addr %s204, 8
      %s206 = scalar_lea.vmem %s5, %s205
      %s207 = smul.u32 4, %s17
      %p208 = scmp.lt.s32.totalorder %s207, 7
      %s209 = scalar_select %p208, %s207, 7
      %s210 = smul.addr %s209, 8
      %s211 = scalar_lea.vmem %s1, %s210
      %s212 = smul.u32 4, %s17
      %s213 = smul.u32 4, %s17
      %p214 = scmp.lt.s32.totalorder %s213, 7
      %s215 = scalar_select %p214, %s213, 7
      %s216 = smul.addr %s215, 8
      %s217 = scalar_lea.vmem %s2, %s216
      %s218 = smul.u32 4, %s17
      %s219 = smul.u32 4, %s17
      %p220 = scmp.lt.s32.totalorder %s219, 7
      %s221 = scalar_select %p220, %s219, 7
      %s222 = smul.addr %s221, 8
      %s223 = scalar_lea.vmem %s5, %s222
      %s224 = smul.u32 4, %s17
      %s225 = sld [smem:[#allocation3]]
      %v226 = vld [vmem:[%s211] sm:$0xff]
      %v227 = vld [vmem:[%s211 + $0x8] sm:$0xff]
      %v228 = vld [vmem:[%s211 + $0x10] sm:$0xff]
      %v229 = vld [vmem:[%s211 + $0x18] sm:$0xff]
      %v230 = vstv %s225
      %vm231 = vcmp.eq.s32.totalorder %v226, %v230
      %vm232 = vcmp.eq.s32.totalorder %v227, %v230
      %vm233 = vcmp.eq.s32.totalorder %v228, %v230
      %vm234 = vcmp.eq.s32.totalorder %v229, %v230
      %v235 = vsel %vm231, 1, 0
      %v236 = vsel %vm232, 1, 0
      %v237 = vsel %vm233, 1, 0
      %v238 = vsel %vm234, 1, 0
      %v239 = vcvt.s32.f32 %v235
      %v240 = vcvt.s32.f32 %v236
      %v241 = vcvt.s32.f32 %v237
      %v242 = vcvt.s32.f32 %v238
      %v243 = vlaneseq
      %v244 = vand.u32 %v243, 127
      %245 = vset.pattern.permute.xlu0 0
      %246 = vperm.xlu0 %245, %v226
      %v247 = vpop.permute.xlu0 %246
      %248 = vset.pattern.permute.xlu0 0
      %249 = vperm.xlu0 %248, %v227
      %v250 = vpop.permute.xlu0 %249
      %251 = vset.pattern.permute.xlu0 0
      %252 = vperm.xlu0 %251, %v228
      %v253 = vpop.permute.xlu0 %252
      %254 = vset.pattern.permute.xlu0 0
      %255 = vperm.xlu0 %254, %v229
      %v256 = vpop.permute.xlu0 %255
      %vm257 = vcmp.eq.s32.totalorder %v247, %v244
      %vm258 = vcmp.eq.s32.totalorder %v250, %v244
      %vm259 = vcmp.eq.s32.totalorder %v253, %v244
      %vm260 = vcmp.eq.s32.totalorder %v256, %v244
      %vm261 = vmxor %vm231, 1
      %vm262 = vmxor %vm232, 1
      %vm263 = vmxor %vm233, 1
      %vm264 = vmxor %vm234, 1
      %v265 = vsel %vm261, 1, 0
      %v266 = vsel %vm262, 1, 0
      %v267 = vsel %vm263, 1, 0
      %v268 = vsel %vm264, 1, 0
      %269 = vset.pattern.permute.xlu0 0
      %270 = vperm.xlu0 %269, %v265
      %v271 = vpop.permute.xlu0 %270
      %272 = vset.pattern.permute.xlu0 0
      %273 = vperm.xlu0 %272, %v266
      %v274 = vpop.permute.xlu0 %273
      %275 = vset.pattern.permute.xlu0 0
      %276 = vperm.xlu0 %275, %v267
      %v277 = vpop.permute.xlu0 %276
      %278 = vset.pattern.permute.xlu0 0
      %279 = vperm.xlu0 %278, %v268
      %v280 = vpop.permute.xlu0 %279
      %vm281 = vcmp.eq.s32.totalorder %v271, 1
      %vm282 = vcmp.eq.s32.totalorder %v274, 1
      %vm283 = vcmp.eq.s32.totalorder %v277, 1
      %vm284 = vcmp.eq.s32.totalorder %v280, 1
      %vm285 = vmand %vm257, %vm281
      %vm286 = vmand %vm258, %vm282
      %vm287 = vmand %vm259, %vm283
      %vm288 = vmand %vm260, %vm284
      %v289 = vsel %vm285, 1, 0
      %v290 = vsel %vm286, 1, 0
      %v291 = vsel %vm287, 1, 0
      %v292 = vsel %vm288, 1, 0
      %v293 = vcvt.s32.f32 %v289
      %v294 = vcvt.s32.f32 %v290
      %v295 = vcvt.s32.f32 %v291
      %v296 = vcvt.s32.f32 %v292
      %vm297 = vcmp.lt.s32.totalorder %v244, 4
      %299 = vset.pattern.permute.xlu0 0
      %300 = vperm.xlu0 %299, %v239
      %v301 = vpop.permute.xlu0 %300
      %304 = vset.pattern.permute.xlu0 0
      %305 = vperm.xlu0 %304, %v240
      %v306 = vpop.permute.xlu0 %305
      %309 = vset.pattern.permute.xlu0 0
      %310 = vperm.xlu0 %309, %v241
      %v311 = vpop.permute.xlu0 %310
      %314 = vset.pattern.permute.xlu0 0
      %315 = vperm.xlu0 %314, %v242
      %v316 = vpop.permute.xlu0 %315
      %v318 = vsel %vm297, %v293, %v301
      %v319 = vsel %vm297, %v294, %v306
      %v320 = vsel %vm297, %v295, %v311
      %v321 = vsel %vm297, %v296, %v316
      %v322 = vld [vmem:[%s217] sm:$0xff]
      %v323 = vld [vmem:[%s217 + $0x8] sm:$0xff]
      %v324 = vld [vmem:[%s217 + $0x10] sm:$0xff]
      %v325 = vld [vmem:[%s217 + $0x18] sm:$0xff]
      %v326 = vmul.f32 %v301, %v322
      %v327 = vmul.f32 %v306, %v323
      %v328 = vmul.f32 %v311, %v324
      %v329 = vmul.f32 %v316, %v325
      %v330 = vld [vmem:[%s3] sm:$0xf]
      %v331 = vld [vmem:[%s4] sm:$0x1f]
      %vm332 = vcmask 39936
      %v334 = vsel %vm332, %v318, 0
      %v337 = vsel %vm332, %v319, 0
      %v340 = vsel %vm332, %v320, 0
      %v343 = vsel %vm332, %v321, 0
      %vm345 = vcmask 1044480
      %v347 = vsel %vm345, %v331, 0
      %349 = vmatprep.subr.mxu0 0.0
      %350 = vmatpush1.msra.mxu0 %v347
      %351 = vmatprep.subr.mxu0 0.0
      %352 = vmatpush1.msra.mxu0 0.0
      %353 = vmatprep.subr.mxu0 0.0
      %354 = vmatpush1.msra.mxu0 0.0
      %355 = vmatprep.subr.mxu0 0.0
      %356 = vmatpush1.msra.mxu0 0.0
      %357 = vmatprep.subr.mxu0 0.0
      %358 = vmatpush1.msra.mxu0 0.0
      %359 = vmatprep.subr.mxu0 0.0
      %360 = vmatpush1.msra.mxu0 0.0
      %361 = vmatprep.subr.mxu0 0.0
      %362 = vmatpush1.msra.mxu0 0.0
      %363 = vmatprep.subr.mxu0 0.0
      %364 = vmatpush1.msra.mxu0 0.0
      %365 = vmatprep.subr.mxu0 0.0
      %366 = vmatpush1.msra.mxu0 0.0
      %367 = vmatprep.subr.mxu0 0.0
      %368 = vmatpush1.msra.mxu0 0.0
      %369 = vmatprep.subr.mxu0 0.0
      %370 = vmatpush1.msra.mxu0 0.0
      %371 = vmatprep.subr.mxu0 0.0
      %372 = vmatpush1.msra.mxu0 0.0
      %373 = vmatprep.subr.mxu0 0.0
      %374 = vmatpush1.msra.mxu0 0.0
      %375 = vmatprep.subr.mxu0 0.0
      %376 = vmatpush1.msra.mxu0 0.0
      %377 = vmatprep.subr.mxu0 0.0
      %378 = vmatpush1.msra.mxu0 0.0
      %379 = vmatprep.subr.mxu0 0.0
      %380 = vmatpush1.msra.mxu0 0.0
      %381 = vmatprep.subr.mxu0 0.0
      %382 = vmatpush1.msra.mxu0 0.0
      %383 = vmatprep.subr.mxu0 0.0
      %384 = vmatpush1.msra.mxu0 0.0
      %385 = vmatprep.subr.mxu0 0.0
      %386 = vmatpush1.msra.mxu0 0.0
      %387 = vmatprep.subr.mxu0 0.0
      %388 = vmatpush1.msra.mxu0 0.0
      %389 = vmatprep.subr.mxu0 0.0
      %390 = vmatpush1.msra.mxu0 0.0
      %391 = vmatprep.subr.mxu0 0.0
      %392 = vmatpush1.msra.mxu0 0.0
      %393 = vmatprep.subr.mxu0 0.0
      %394 = vmatpush1.msra.mxu0 0.0
      %395 = vmatprep.subr.mxu0 0.0
      %396 = vmatpush1.msra.mxu0 0.0
      %397 = vmatprep.subr.mxu0 0.0
      %398 = vmatpush1.msra.mxu0 0.0
      %399 = vmatprep.subr.mxu0 0.0
      %400 = vmatpush1.msra.mxu0 0.0
      %401 = vmatprep.subr.mxu0 0.0
      %402 = vmatpush1.msra.mxu0 0.0
      %403 = vmatprep.subr.mxu0 0.0
      %404 = vmatpush1.msra.mxu0 0.0
      %405 = vmatprep.subr.mxu0 0.0
      %406 = vmatpush1.msra.mxu0 0.0
      %407 = vmatprep.subr.mxu0 0.0
      %408 = vmatpush1.msra.mxu0 0.0
      %409 = vmatprep.subr.mxu0 0.0
      %410 = vmatpush1.msra.mxu0 0.0
      %411 = vmatprep.subr.mxu0 0.0
      %412 = vmatpush1.msra.mxu0 0.0
      %413 = vmatprep.mubr.f32.mxu0 0.0
      %414 = vmatmul.mubr.f32.gmra.mrb[0].mxu0 %v334
      %v415 = vpop.f32.mrb[0].mxu0
      %v416 = vadd.f32 0.0, %v415
      %v417 = vpop.f32.mrb[0].mxu0
      %418 = vmatprep.mubr.f32.mxu0 0.0
      %419 = vmatmul.mubr.f32.gmra.mrb[0].mxu0 %v337
      %v420 = vpop.f32.mrb[0].mxu0
      %v421 = vadd.f32 0.0, %v420
      %v422 = vpop.f32.mrb[0].mxu0
      %423 = vmatprep.mubr.f32.mxu0 0.0
      %424 = vmatmul.mubr.f32.gmra.mrb[0].mxu0 %v340
      %v425 = vpop.f32.mrb[0].mxu0
      %v426 = vadd.f32 0.0, %v425
      %v427 = vpop.f32.mrb[0].mxu0
      %428 = vmatprep.mubr.f32.mxu0 0.0
      %429 = vmatmul.mubr.f32.gmra.mrb[0].mxu0 %v343
      %v430 = vpop.f32.mrb[0].mxu0
      %v431 = vadd.f32 0.0, %v430
      %v432 = vpop.f32.mrb[0].mxu0
      %433 = vdwg.mxu0
      %vm434 = vcmask 31744
      %v436 = vsel %vm434, %v326, 0
      %v439 = vsel %vm434, %v327, 0
      %v442 = vsel %vm434, %v328, 0
      %v445 = vsel %vm434, %v329, 0
      %vm447 = vcmask 1043456
      %v449 = vsel %vm447, %v330, 0
      %451 = vmatprep.subr.mxu0 0.0
      %452 = vmatpush1.msra.mxu0 %v449
      %453 = vmatprep.subr.mxu0 0.0
      %454 = vmatpush1.msra.mxu0 0.0
      %455 = vmatprep.subr.mxu0 0.0
      %456 = vmatpush1.msra.mxu0 0.0
      %457 = vmatprep.subr.mxu0 0.0
      %458 = vmatpush1.msra.mxu0 0.0
      %459 = vmatprep.subr.mxu0 0.0
      %460 = vmatpush1.msra.mxu0 0.0
      %461 = vmatprep.subr.mxu0 0.0
      %462 = vmatpush1.msra.mxu0 0.0
      %463 = vmatprep.subr.mxu0 0.0
      %464 = vmatpush1.msra.mxu0 0.0
      %465 = vmatprep.subr.mxu0 0.0
      %466 = vmatpush1.msra.mxu0 0.0
      %467 = vmatprep.subr.mxu0 0.0
      %468 = vmatpush1.msra.mxu0 0.0
      %469 = vmatprep.subr.mxu0 0.0
      %470 = vmatpush1.msra.mxu0 0.0
      %471 = vmatprep.subr.mxu0 0.0
      %472 = vmatpush1.msra.mxu0 0.0
      %473 = vmatprep.subr.mxu0 0.0
      %474 = vmatpush1.msra.mxu0 0.0
      %475 = vmatprep.subr.mxu0 0.0
      %476 = vmatpush1.msra.mxu0 0.0
      %477 = vmatprep.subr.mxu0 0.0
      %478 = vmatpush1.msra.mxu0 0.0
      %479 = vmatprep.subr.mxu0 0.0
      %480 = vmatpush1.msra.mxu0 0.0
      %481 = vmatprep.subr.mxu0 0.0
      %482 = vmatpush1.msra.mxu0 0.0
      %483 = vmatprep.subr.mxu0 0.0
      %484 = vmatpush1.msra.mxu0 0.0
      %485 = vmatprep.subr.mxu0 0.0
      %486 = vmatpush1.msra.mxu0 0.0
      %487 = vmatprep.subr.mxu0 0.0
      %488 = vmatpush1.msra.mxu0 0.0
      %489 = vmatprep.subr.mxu0 0.0
      %490 = vmatpush1.msra.mxu0 0.0
      %491 = vmatprep.subr.mxu0 0.0
      %492 = vmatpush1.msra.mxu0 0.0
      %493 = vmatprep.subr.mxu0 0.0
      %494 = vmatpush1.msra.mxu0 0.0
      %495 = vmatprep.subr.mxu0 0.0
      %496 = vmatpush1.msra.mxu0 0.0
      %497 = vmatprep.subr.mxu0 0.0
      %498 = vmatpush1.msra.mxu0 0.0
      %499 = vmatprep.subr.mxu0 0.0
      %500 = vmatpush1.msra.mxu0 0.0
      %501 = vmatprep.subr.mxu0 0.0
      %502 = vmatpush1.msra.mxu0 0.0
      %503 = vmatprep.subr.mxu0 0.0
      %504 = vmatpush1.msra.mxu0 0.0
      %505 = vmatprep.subr.mxu0 0.0
      %506 = vmatpush1.msra.mxu0 0.0
      %507 = vmatprep.subr.mxu0 0.0
      %508 = vmatpush1.msra.mxu0 0.0
      %509 = vmatprep.subr.mxu0 0.0
      %510 = vmatpush1.msra.mxu0 0.0
      %511 = vmatprep.subr.mxu0 0.0
      %512 = vmatpush1.msra.mxu0 0.0
      %513 = vmatprep.subr.mxu0 0.0
      %514 = vmatpush1.msra.mxu0 0.0
      %515 = vmatprep.mubr.f32.mxu0 0.0
      %516 = vmatmul.mubr.f32.gmra.mrb[0].mxu0 %v436
      %v517 = vpop.f32.mrb[0].mxu0
      %v518 = vadd.f32 %v416, %v517
      %v519 = vpop.f32.mrb[0].mxu0
      %520 = vmatprep.mubr.f32.mxu0 0.0
      %521 = vmatmul.mubr.f32.gmra.mrb[0].mxu0 %v439
      %v522 = vpop.f32.mrb[0].mxu0
      %v523 = vadd.f32 %v421, %v522
      %v524 = vpop.f32.mrb[0].mxu0
      %525 = vmatprep.mubr.f32.mxu0 0.0
      %526 = vmatmul.mubr.f32.gmra.mrb[0].mxu0 %v442
      %v527 = vpop.f32.mrb[0].mxu0
      %v528 = vadd.f32 %v426, %v527
      %v529 = vpop.f32.mrb[0].mxu0
      %530 = vmatprep.mubr.f32.mxu0 0.0
      %531 = vmatmul.mubr.f32.gmra.mrb[0].mxu0 %v445
      %v532 = vpop.f32.mrb[0].mxu0
      %v533 = vadd.f32 %v431, %v532
      %v534 = vpop.f32.mrb[0].mxu0
      %535 = vdwg.mxu0
      %vm536 = vcmask 261120
      %537 = vst.msk [vmem:[%s223] sm:$0xff] %vm536, %v518
      %538 = vst.msk [vmem:[%s223 + $0x8] sm:$0xff] %vm536, %v523
      %539 = vst.msk [vmem:[%s223 + $0x10] sm:$0xff] %vm536, %v528
      %540 = vst.msk [vmem:[%s223 + $0x18] sm:$0xff] %vm536, %v533
      %s541 = smul.u32 4, %s17
      %p542 = scmp.lt.s32.totalorder %s541, 7
      %s543 = scalar_select %p542, %s541, 7
      %s544 = smul.addr %s543, 8
      %s545 = scalar_lea.vmem %s5, %s544
      // Predicated region
      $region37: #{tpu_custom_call.1} parent=35 // pred_check
        %p546 = pneg %p129
      $region38: #{tpu_custom_call.1} parent=35 // pred_check_branch
        %548 = sbr.rel (%p546) target = $region40
      $region39: #{tpu_custom_call.1} parent=35 // pred_region
        %s549 = smul.u32 4, %s17
      $region40: #{tpu_custom_call.1} parent=35 // pred_fallthru
        _
    $region36: #{tpu_custom_call.1} parent=5 // pred_fallthru
      _
    %p550 = scmp.le.s32.totalorder 2, %s12
    // Predicated region
    $region41: #{tpu_custom_call.1} parent=5 // pred_check
      %p551 = pneg %p550
    $region42: #{tpu_custom_call.1} parent=5 // pred_check_branch
      %553 = sbr.rel (%p551) target = $region44
    $region43: #{tpu_custom_call.1} parent=5 // pred_region
      %s554 = ssub.s32 %s12, 2
      // Predicated region
      $region45: #{tpu_custom_call.1} parent=43 // pred_check
        %p555 = pneg %p135
      $region46: #{tpu_custom_call.1} parent=43 // pred_check_branch
        %557 = sbr.rel (%p555) target = $region48
      $region47: #{tpu_custom_call.1} parent=43 // pred_region
        %s558 = smul.u32 4, %s18
        %p559 = scmp.lt.s32.totalorder %s558, 7
        %s560 = scalar_select %p559, %s558, 7
        %s561 = smul.addr %s560, 8
        %s562 = scalar_lea.vmem %s5, %s561
      $region48: #{tpu_custom_call.1} parent=43 // pred_fallthru
        _
    $region44: #{tpu_custom_call.1} parent=5 // pred_fallthru
      _
  $region6: #{tpu_custom_call.1} parent=0 // loop_footer
    %s16 = sadd.s32 1, %s12
  $region7: #{tpu_custom_call.1} parent=0 // loop_footer_branch
    %11 = sbr.rel target = $region3
  $region8: #{tpu_custom_call.1} parent=0 // loop_exit
    _

</llo_original>
